<compile_context>
chip_gen: v7x
topology: tpu7x:2x2x1
jax: 0.10.0
libtpu: 0.0.40
codegen_flags: <defaults>
</compile_context>

<pallas_src>
import numpy as np
import jax
import jax.numpy as jnp
from jax import lax
from jax.experimental import pallas as pl
from jax.experimental.pallas import tpu as pltpu

N_FFT = 128
HOP = 32
WIN = 64
LANE = 128            # lane-padded freq width (n_freq = 65 -> 128 lanes)
SC = 32               # frame rows per signal per inner-loop step (64 MXU rows)
TM_MAX = 2048         # frame rows per grid step
HALO = 8              # >= n_fft//hop - 1, kept a multiple of 8 for sublanes
EPS_POW = 1e-8        # torch.clamp(M**2 + P**2, min=1e-08) in the reference


# ---------------------------------------------------------------- glue helpers
def _cdiv(a, b):
    return -(-a // b)


def _round_up(x, m):
    return _cdiv(x, m) * m


def _hann_window(win_length):
    # torch.hann_window default is periodic=True
    n = np.arange(win_length, dtype=np.float64)
    return 0.5 - 0.5 * np.cos(2.0 * np.pi * n / win_length)


def _windowed_basis(n_fft, win_length, lane):
    """[n_fft, 2*lane]: cols [0,n_freq)=w*cos, [lane,lane+n_freq)=-w*sin, rest 0.

    The centered hann window (torch.stft pads win_length -> n_fft) is folded
    into the DFT basis so no per-frame windowing is needed in the kernel.
    """
    n_freq = n_fft // 2 + 1
    n = np.arange(n_fft, dtype=np.float64)[:, None]
    f = np.arange(n_freq, dtype=np.float64)[None, :]
    ang = 2.0 * np.pi * n * f / n_fft
    w = np.zeros((n_fft,), np.float64)
    lpad = (n_fft - win_length) // 2
    w[lpad:lpad + win_length] = _hann_window(win_length)
    basis = np.zeros((n_fft, 2 * lane), np.float64)
    basis[:, :n_freq] = w[:, None] * np.cos(ang)
    basis[:, lane:lane + n_freq] = -w[:, None] * np.sin(ang)   # torch.stft sign
    return basis.astype(np.float32)


# ---------------------------------------------------------------- Pallas kernel
def _fold8(x):
    """[r, c] -> [8, c] partial sums (pure VPU adds, r multiple of 8)."""
    r, c = x.shape
    return jnp.sum(x.reshape(r // 8, 8, c), axis=0)


def _make_kernel(n_frames, tm, n_fft, hop, lane):
    n_phase = n_fft // hop            # 4 hop-strided chunk slices per frame
    n_inner = tm // SC

    def kernel(ch_ref, cy_ref, wb_ref, out_ref):
        j = pl.program_id(1)
        wb = wb_ref[...]                                  # [n_fft, 2*lane]
        row_limit = n_frames - j * tm                     # valid rows this tile

        def body(k, carry):
            acc_log, acc_d2, acc_py = carry
            r0 = pl.multiple_of(k * SC, SC)
            # Frame-row validity mask; all-ones except on the last tile.
            rid = lax.broadcasted_iota(jnp.int32, (SC, lane), 0) + r0
            rmask = (rid < row_limit).astype(jnp.float32)  # [SC, lane]

            def frames(ref):
                # frame r = chunk rows r .. r+n_phase-1 concatenated along lanes
                pieces = [ref[0, 0, pl.ds(r0 + q, SC), :] for q in range(n_phase)]
                return jnp.concatenate(pieces, axis=1) * rmask   # [SC, n_fft]

            # One MXU stream per inner step: stack y_hat and y frame chunks.
            F = jnp.concatenate([frames(ch_ref), frames(cy_ref)], axis=0)
            S = jnp.dot(F, wb, preferred_element_type=jnp.float32)  # [2SC,2lane]
            re = S[:, :lane]
            im = S[:, lane:]
            p = jnp.maximum(re * re + im * im, EPS_POW)
            s = jnp.sqrt(p)
            ls = jnp.log(s)
            # masked / padded positions clamp to EPS for both signals -> both
            # terms below are exactly zero there (no extra masking needed).
            al = jnp.abs(ls[SC:] - ls[:SC])                # |log S(y)-log S(yh)|
            d = s[SC:] - s[:SC]                            # S(y) - S(y_hat)
            py = p[SC:] * rmask                            # |S(y)|^2, valid rows
            return (acc_log + _fold8(al),
                    acc_d2 + _fold8(d * d),
                    acc_py + _fold8(py))

        zero = jnp.zeros((8, lane), jnp.float32)
        acc_log, acc_d2, acc_py = lax.fori_loop(
            0, n_inner, body, (zero, zero, zero), unroll=True)

        out_ref[0, 0, :, 0 * lane:1 * lane] = acc_log
        out_ref[0, 0, :, 1 * lane:2 * lane] = acc_d2
        out_ref[0, 0, :, 2 * lane:3 * lane] = acc_py

    return kernel


def stft_loss(y_hat, y, n_fft=N_FFT, hop=HOP, win_length=WIN, tm_max=TM_MAX):
    """Returns (loss_mag, loss_sc) — scalars matching STFTLoss.forward."""
    y_hat = jnp.asarray(y_hat, jnp.float32)
    y = jnp.asarray(y, jnp.float32)
    assert y_hat.shape == y.shape and y_hat.ndim == 2
    assert n_fft % hop == 0 and n_fft == LANE, "kernel specialized to n_fft=128"
    B, T = y.shape
    pad = n_fft // 2
    if T <= pad:
        raise ValueError("reflect padding (center=True) needs T > n_fft // 2")

    Lp = T + 2 * pad
    n_freq = n_fft // 2 + 1
    n_frames = 1 + (Lp - n_fft) // hop

    # Frame rows per grid step: multiple of the inner chunk SC; big enough to
    # amortize the ~0.35us per-step overhead, adaptive for tiny inputs.
    tm = min(_round_up(n_frames, SC), _round_up(tm_max, SC))
    tiles = _cdiv(n_frames, tm)
    # v7x: make sure there are >= 2 grid steps so both TensorCores get work.
    if B * tiles < 2 and tm > SC:
        tm = _round_up(_cdiv(n_frames, 2), SC)
        tiles = _cdiv(n_frames, tm)

    # ---- in-kernel framing prep --------------------------------------------
    # Reflect pad (torch.stft center=True), zero-pad the tail, then present the
    # signal as non-overlapping hop-wide chunk rows per tile.  Only an 8-row
    # halo per tile is duplicated (1 KiB) instead of the 4x frame blow-up.
    total_chunks = tiles * tm + HALO

    def prep(x):
        xp = jnp.pad(x, ((0, 0), (pad, pad)), mode="reflect")
        xp = jnp.pad(xp, ((0, 0), (0, total_chunks * hop - Lp)))
        slabs = [lax.slice_in_dim(xp, j * tm * hop,
                                  (j * tm + tm + HALO) * hop, axis=1)
                 for j in range(tiles)]
        return jnp.stack(slabs, axis=1).reshape(B, tiles, tm + HALO, hop)

    ch = prep(y_hat)
    cy = prep(y)
    wbasis = jnp.asarray(_windowed_basis(n_fft, win_length, LANE))

    kernel = _make_kernel(n_frames, tm, n_fft, hop, LANE)

    partials = pl.pallas_call(
        kernel,
        out_shape=jax.ShapeDtypeStruct((B, tiles, 8, 3 * LANE), jnp.float32),
        grid_spec=pltpu.PrefetchScalarGridSpec(
            num_scalar_prefetch=0,
            grid=(B, tiles),
            in_specs=[
                pl.BlockSpec((1, 1, tm + HALO, hop), lambda b, j: (b, j, 0, 0)),
                pl.BlockSpec((1, 1, tm + HALO, hop), lambda b, j: (b, j, 0, 0)),
                pl.BlockSpec((n_fft, 2 * LANE), lambda b, j: (0, 0)),
            ],
            out_specs=pl.BlockSpec((1, 1, 8, 3 * LANE), lambda b, j: (b, j, 0, 0)),
        ),
        compiler_params=pltpu.CompilerParams(
            dimension_semantics=("parallel", "parallel")),
    )(ch, cy, wbasis)

    s_abs = jnp.sum(partials[..., 0 * LANE:1 * LANE])
    s_sqd = jnp.sum(partials[..., 1 * LANE:2 * LANE])
    # padded freq lanes (>= n_freq) of the |S(y)|^2 partial hold eps clamps;
    # just don't sum them (cheaper & more robust than masking in the kernel).
    s_sqy = jnp.sum(partials[..., 2 * LANE:2 * LANE + n_freq])

    n_elems = jnp.float32(B * n_frames * n_freq)
    loss_mag = s_abs / n_elems                     # l1_loss(mean) on log-mags
    loss_sc = jnp.sqrt(s_sqd) / jnp.sqrt(s_sqy)
    return loss_mag, loss_sc


# ---------------------------------------------------------------- pure-JAX ref
def _reference(y_hat, y, n_fft, hop, win_length):
    n_freq = n_fft // 2 + 1
    n = np.arange(n_fft, dtype=np.float64)[:, None]
    f = np.arange(n_freq, dtype=np.float64)[None, :]
    ang = 2.0 * np.pi * n * f / n_fft
    cos_b = jnp.asarray(np.cos(ang), jnp.float32)
    sin_b = jnp.asarray(-np.sin(ang), jnp.float32)
    w = np.zeros((n_fft,), np.float64)
    lpad = (n_fft - win_length) // 2
    w[lpad:lpad + win_length] = _hann_window(win_length)
    w = jnp.asarray(w, jnp.float32)

    def spec(x):
        x = jnp.asarray(x, jnp.float32)
        pad = n_fft // 2
        xp = jnp.pad(x, ((0, 0), (pad, pad)), mode="reflect")
        n_frames = 1 + (xp.shape[1] - n_fft) // hop
        idx = np.arange(n_frames)[:, None] * hop + np.arange(n_fft)[None, :]
        fr = xp[:, idx] * w                               # [B, n_frames, n_fft]
        re = jnp.matmul(fr, cos_b, precision=lax.Precision.HIGHEST)
        im = jnp.matmul(fr, sin_b, precision=lax.Precision.HIGHEST)
        return jnp.sqrt(jnp.maximum(re * re + im * im, EPS_POW))

    s_h = spec(y_hat)
    s_y = spec(y)
    loss_mag = jnp.mean(jnp.abs(jnp.log(s_y) - jnp.log(s_h)))
    loss_sc = jnp.sqrt(jnp.sum((s_y - s_h) ** 2)) / jnp.sqrt(jnp.sum(s_y ** 2))
    return loss_mag, loss_sc


if __name__ == "__main__":
    key = jax.random.PRNGKey(0)
    k1, k2, k3, k4 = jax.random.split(key, 4)

    # Small shapes consistent with the module: a batch of short waveforms.
    B, T = 2, 256
    y_hat = 0.1 * jax.random.normal(k1, (B, T), dtype=jnp.float32)
    y = 0.1 * jax.random.normal(k2, (B, T), dtype=jnp.float32)

    loss_mag, loss_sc = stft_loss(y_hat, y)
    jax.block_until_ready((loss_mag, loss_sc))
    ref_mag, ref_sc = _reference(y_hat, y, N_FFT, HOP, WIN)
    assert jnp.isfinite(loss_mag) and jnp.isfinite(loss_sc)
    np.testing.assert_allclose(float(loss_mag), float(ref_mag), rtol=2e-3, atol=1e-5)
    np.testing.assert_allclose(float(loss_sc), float(ref_sc), rtol=2e-3, atol=1e-5)

    # Longer mono signal: exercises the >=2-tile split (v7x guard), multi-tile
    # grid, and the partial last tile (row masking) path.
    B2, T2 = 1, 4096
    y_hat2 = 0.1 * jax.random.normal(k3, (B2, T2), dtype=jnp.float32)
    y2 = 0.1 * jax.random.normal(k4, (B2, T2), dtype=jnp.float32)
    lm2, ls2 = stft_loss(y_hat2, y2)                 # tm split into 2 tiles
    lm3, ls3 = stft_loss(y_hat2, y2, tm_max=32)      # 5 tiles, 1 valid row last
    jax.block_until_ready((lm2, ls2, lm3, ls3))
    rm2, rs2 = _reference(y_hat2, y2, N_FFT, HOP, WIN)
    np.testing.assert_allclose(float(lm2), float(rm2), rtol=2e-3, atol=1e-5)
    np.testing.assert_allclose(float(ls2), float(rs2), rtol=2e-3, atol=1e-5)
    np.testing.assert_allclose(float(lm3), float(rm2), rtol=2e-3, atol=1e-5)
    np.testing.assert_allclose(float(ls3), float(rs2), rtol=2e-3, atol=1e-5)

    print("KERNEL_OK")
</pallas_src>

<mosaic_0001>
module attributes {stable_mosaic.version = 11 : i64} {
  func.func @kernel(%arg0: i32, %arg1: i32, %arg2: memref<1x1x40x32xf32, #tpu.memory_space<vmem>>, %arg3: memref<1x1x40x32xf32, #tpu.memory_space<vmem>>, %arg4: memref<128x256xf32, #tpu.memory_space<vmem>>, %arg5: memref<1x1x8x384xf32, #tpu.memory_space<vmem>>) attributes {dimension_semantics = [#tpu.dimension_semantics<parallel>, #tpu.dimension_semantics<parallel>], iteration_bounds = array<i64: 2, 1>, scalar_prefetch = 0 : i64, scratch_operands = 0 : i64, tpu.core_type = #tpu.core_type<tc>, window_params = [{transform_indices = @transform_0, window_bounds = array<i64: 1, 1, 40, 32>}, {transform_indices = @transform_1, window_bounds = array<i64: 1, 1, 40, 32>}, {pipeline_mode = #tpu.pipeline_mode<synchronous>, transform_indices = @transform_2, window_bounds = array<i64: 128, 256>}, {transform_indices = @transform_3, window_bounds = array<i64: 1, 1, 8, 384>}]} {
    %c0 = arith.constant 0 : index
    %c0_0 = arith.constant 0 : index
    %0 = vector.load %arg4[%c0, %c0_0] : memref<128x256xf32, #tpu.memory_space<vmem>>, vector<128x256xf32>
    %c32_i32 = arith.constant 32 : i32
    %1 = arith.muli %arg1, %c32_i32 : i32
    %c9_i32 = arith.constant 9 : i32
    %2 = arith.subi %c9_i32, %1 : i32
    %cst = arith.constant 0.000000e+00 : f32
    %3 = vector.broadcast %cst : f32 to vector<8x128xf32>
    %c0_i32 = arith.constant 0 : i32
    %c32_i32_1 = arith.constant 32 : i32
    %4 = arith.muli %c0_i32, %c32_i32_1 : i32
    %5 = tpu.assume_multiple %4, 32 : i32
    %6 = tpu.iota {dimensions = array<i32: 0>} : vector<32x128xi32>
    %7 = vector.broadcast %5 : i32 to vector<32x128xi32>
    %8 = arith.addi %6, %7 : vector<32x128xi32>
    %9 = vector.broadcast %2 : i32 to vector<32x128xi32>
    %10 = arith.cmpi slt, %8, %9 : vector<32x128xi32>
    %11 = arith.extui %10 : vector<32x128xi1> to vector<32x128xi32>
    %12 = arith.sitofp %11 : vector<32x128xi32> to vector<32x128xf32>
    %c0_i32_2 = arith.constant 0 : i32
    %13 = arith.addi %5, %c0_i32_2 : i32
    %c0_3 = arith.constant 0 : index
    %c0_4 = arith.constant 0 : index
    %14 = arith.index_cast %13 : i32 to index
    %c0_5 = arith.constant 0 : index
    %15 = vector.load %arg2[%c0_3, %c0_4, %14, %c0_5] : memref<1x1x40x32xf32, #tpu.memory_space<vmem>>, vector<1x1x32x32xf32>
    %16 = vector.shape_cast %15 : vector<1x1x32x32xf32> to vector<32x32xf32>
    %c1_i32 = arith.constant 1 : i32
    %17 = arith.addi %5, %c1_i32 : i32
    %c0_6 = arith.constant 0 : index
    %c0_7 = arith.constant 0 : index
    %18 = arith.index_cast %17 : i32 to index
    %c0_8 = arith.constant 0 : index
    %19 = vector.load %arg2[%c0_6, %c0_7, %18, %c0_8] : memref<1x1x40x32xf32, #tpu.memory_space<vmem>>, vector<1x1x32x32xf32>
    %20 = vector.shape_cast %19 : vector<1x1x32x32xf32> to vector<32x32xf32>
    %c2_i32 = arith.constant 2 : i32
    %21 = arith.addi %5, %c2_i32 : i32
    %c0_9 = arith.constant 0 : index
    %c0_10 = arith.constant 0 : index
    %22 = arith.index_cast %21 : i32 to index
    %c0_11 = arith.constant 0 : index
    %23 = vector.load %arg2[%c0_9, %c0_10, %22, %c0_11] : memref<1x1x40x32xf32, #tpu.memory_space<vmem>>, vector<1x1x32x32xf32>
    %24 = vector.shape_cast %23 : vector<1x1x32x32xf32> to vector<32x32xf32>
    %c3_i32 = arith.constant 3 : i32
    %25 = arith.addi %5, %c3_i32 : i32
    %c0_12 = arith.constant 0 : index
    %c0_13 = arith.constant 0 : index
    %26 = arith.index_cast %25 : i32 to index
    %c0_14 = arith.constant 0 : index
    %27 = vector.load %arg2[%c0_12, %c0_13, %26, %c0_14] : memref<1x1x40x32xf32, #tpu.memory_space<vmem>>, vector<1x1x32x32xf32>
    %28 = vector.shape_cast %27 : vector<1x1x32x32xf32> to vector<32x32xf32>
    %29 = tpu.concatenate %16, %20, %24, %28 in 1 : vector<32x32xf32>, vector<32x32xf32>, vector<32x32xf32>, vector<32x32xf32> -> vector<32x128xf32>
    %30 = arith.mulf %29, %12 : vector<32x128xf32>
    %c0_i32_15 = arith.constant 0 : i32
    %31 = arith.addi %5, %c0_i32_15 : i32
    %c0_16 = arith.constant 0 : index
    %c0_17 = arith.constant 0 : index
    %32 = arith.index_cast %31 : i32 to index
    %c0_18 = arith.constant 0 : index
    %33 = vector.load %arg3[%c0_16, %c0_17, %32, %c0_18] : memref<1x1x40x32xf32, #tpu.memory_space<vmem>>, vector<1x1x32x32xf32>
    %34 = vector.shape_cast %33 : vector<1x1x32x32xf32> to vector<32x32xf32>
    %c1_i32_19 = arith.constant 1 : i32
    %35 = arith.addi %5, %c1_i32_19 : i32
    %c0_20 = arith.constant 0 : index
    %c0_21 = arith.constant 0 : index
    %36 = arith.index_cast %35 : i32 to index
    %c0_22 = arith.constant 0 : index
    %37 = vector.load %arg3[%c0_20, %c0_21, %36, %c0_22] : memref<1x1x40x32xf32, #tpu.memory_space<vmem>>, vector<1x1x32x32xf32>
    %38 = vector.shape_cast %37 : vector<1x1x32x32xf32> to vector<32x32xf32>
    %c2_i32_23 = arith.constant 2 : i32
    %39 = arith.addi %5, %c2_i32_23 : i32
    %c0_24 = arith.constant 0 : index
    %c0_25 = arith.constant 0 : index
    %40 = arith.index_cast %39 : i32 to index
    %c0_26 = arith.constant 0 : index
    %41 = vector.load %arg3[%c0_24, %c0_25, %40, %c0_26] : memref<1x1x40x32xf32, #tpu.memory_space<vmem>>, vector<1x1x32x32xf32>
    %42 = vector.shape_cast %41 : vector<1x1x32x32xf32> to vector<32x32xf32>
    %c3_i32_27 = arith.constant 3 : i32
    %43 = arith.addi %5, %c3_i32_27 : i32
    %c0_28 = arith.constant 0 : index
    %c0_29 = arith.constant 0 : index
    %44 = arith.index_cast %43 : i32 to index
    %c0_30 = arith.constant 0 : index
    %45 = vector.load %arg3[%c0_28, %c0_29, %44, %c0_30] : memref<1x1x40x32xf32, #tpu.memory_space<vmem>>, vector<1x1x32x32xf32>
    %46 = vector.shape_cast %45 : vector<1x1x32x32xf32> to vector<32x32xf32>
    %47 = tpu.concatenate %34, %38, %42, %46 in 1 : vector<32x32xf32>, vector<32x32xf32>, vector<32x32xf32>, vector<32x32xf32> -> vector<32x128xf32>
    %48 = arith.mulf %47, %12 : vector<32x128xf32>
    %49 = tpu.concatenate %30, %48 in 0 : vector<32x128xf32>, vector<32x128xf32> -> vector<64x128xf32>
    %cst_31 = arith.constant dense<0.000000e+00> : vector<64x256xf32>
    %50 = tpu.matmul %49, %0, %cst_31 {dimension_numbers = #tpu.dot_dimension_numbers<[1], [0], [0], [1], [0, 0, 1, 1], [], []>} : vector<64x128xf32>, vector<128x256xf32>, vector<64x256xf32> -> vector<64x256xf32>
    %51 = vector.extract_strided_slice %50 {offsets = [0, 0], sizes = [64, 128], strides = [1, 1]} : vector<64x256xf32> to vector<64x128xf32>
    %52 = vector.extract_strided_slice %50 {offsets = [0, 128], sizes = [64, 128], strides = [1, 1]} : vector<64x256xf32> to vector<64x128xf32>
    %53 = arith.mulf %51, %51 : vector<64x128xf32>
    %54 = arith.mulf %52, %52 : vector<64x128xf32>
    %55 = arith.addf %53, %54 : vector<64x128xf32>
    %cst_32 = arith.constant 9.99999993E-9 : f32
    %56 = vector.broadcast %cst_32 : f32 to vector<64x128xf32>
    %57 = arith.maximumf %55, %56 : vector<64x128xf32>
    %58 = math.sqrt %57 : vector<64x128xf32>
    %59 = math.log %58 : vector<64x128xf32>
    %60 = vector.extract_strided_slice %59 {offsets = [32, 0], sizes = [32, 128], strides = [1, 1]} : vector<64x128xf32> to vector<32x128xf32>
    %61 = vector.extract_strided_slice %59 {offsets = [0, 0], sizes = [32, 128], strides = [1, 1]} : vector<64x128xf32> to vector<32x128xf32>
    %62 = arith.subf %60, %61 : vector<32x128xf32>
    %63 = math.absf %62 : vector<32x128xf32>
    %64 = vector.extract_strided_slice %58 {offsets = [32, 0], sizes = [32, 128], strides = [1, 1]} : vector<64x128xf32> to vector<32x128xf32>
    %65 = vector.extract_strided_slice %58 {offsets = [0, 0], sizes = [32, 128], strides = [1, 1]} : vector<64x128xf32> to vector<32x128xf32>
    %66 = arith.subf %64, %65 : vector<32x128xf32>
    %67 = vector.extract_strided_slice %57 {offsets = [32, 0], sizes = [32, 128], strides = [1, 1]} : vector<64x128xf32> to vector<32x128xf32>
    %68 = arith.mulf %67, %12 : vector<32x128xf32>
    %69 = vector.shape_cast %63 : vector<32x128xf32> to vector<4x8x128xf32>
    %cst_33 = arith.constant dense<0.000000e+00> : vector<8x128xf32>
    %70 = vector.multi_reduction <add>, %69, %cst_33 [0] : vector<4x8x128xf32> to vector<8x128xf32>
    %71 = arith.addf %3, %70 : vector<8x128xf32>
    %72 = arith.mulf %66, %66 : vector<32x128xf32>
    %73 = vector.shape_cast %72 : vector<32x128xf32> to vector<4x8x128xf32>
    %cst_34 = arith.constant dense<0.000000e+00> : vector<8x128xf32>
    %74 = vector.multi_reduction <add>, %73, %cst_34 [0] : vector<4x8x128xf32> to vector<8x128xf32>
    %75 = arith.addf %3, %74 : vector<8x128xf32>
    %76 = vector.shape_cast %68 : vector<32x128xf32> to vector<4x8x128xf32>
    %cst_35 = arith.constant dense<0.000000e+00> : vector<8x128xf32>
    %77 = vector.multi_reduction <add>, %76, %cst_35 [0] : vector<4x8x128xf32> to vector<8x128xf32>
    %78 = arith.addf %3, %77 : vector<8x128xf32>
    %c1_i32_36 = arith.constant 1 : i32
    %c0_37 = arith.constant 0 : index
    %c0_38 = arith.constant 0 : index
    %c0_39 = arith.constant 0 : index
    %c0_40 = arith.constant 0 : index
    %79 = vector.load %arg5[%c0_37, %c0_38, %c0_39, %c0_40] : memref<1x1x8x384xf32, #tpu.memory_space<vmem>>, vector<1x1x8x128xf32>
    %80 = vector.shape_cast %79 : vector<1x1x8x128xf32> to vector<8x128xf32>
    %81 = vector.shape_cast %71 : vector<8x128xf32> to vector<1x1x8x128xf32>
    tpu.vector_store %arg5[%c0_37, %c0_38, %c0_39, %c0_40], %81 {strides = array<i32>} : memref<1x1x8x384xf32, #tpu.memory_space<vmem>>, vector<1x1x8x128xf32>,
    %c0_41 = arith.constant 0 : index
    %c0_42 = arith.constant 0 : index
    %c0_43 = arith.constant 0 : index
    %c128 = arith.constant 128 : index
    %82 = vector.load %arg5[%c0_41, %c0_42, %c0_43, %c128] : memref<1x1x8x384xf32, #tpu.memory_space<vmem>>, vector<1x1x8x128xf32>
    %83 = vector.shape_cast %82 : vector<1x1x8x128xf32> to vector<8x128xf32>
    %84 = vector.shape_cast %75 : vector<8x128xf32> to vector<1x1x8x128xf32>
    tpu.vector_store %arg5[%c0_41, %c0_42, %c0_43, %c128], %84 {strides = array<i32>} : memref<1x1x8x384xf32, #tpu.memory_space<vmem>>, vector<1x1x8x128xf32>,
    %c0_44 = arith.constant 0 : index
    %c0_45 = arith.constant 0 : index
    %c0_46 = arith.constant 0 : index
    %c256 = arith.constant 256 : index
    %85 = vector.load %arg5[%c0_44, %c0_45, %c0_46, %c256] : memref<1x1x8x384xf32, #tpu.memory_space<vmem>>, vector<1x1x8x128xf32>
    %86 = vector.shape_cast %85 : vector<1x1x8x128xf32> to vector<8x128xf32>
    %87 = vector.shape_cast %78 : vector<8x128xf32> to vector<1x1x8x128xf32>
    tpu.vector_store %arg5[%c0_44, %c0_45, %c0_46, %c256], %87 {strides = array<i32>} : memref<1x1x8x384xf32, #tpu.memory_space<vmem>>, vector<1x1x8x128xf32>,
    return
  }
  func.func @transform_0(%arg0: i32, %arg1: i32) -> (i32, i32, i32, i32) {
    %c0_i32 = arith.constant 0 : i32
    %c0_i32_0 = arith.constant 0 : i32
    %c0_i32_1 = arith.constant 0 : i32
    return %arg0, %arg1, %c0_i32, %c0_i32_0 : i32, i32, i32, i32
  }
  func.func @transform_1(%arg0: i32, %arg1: i32) -> (i32, i32, i32, i32) {
    %c0_i32 = arith.constant 0 : i32
    %c0_i32_0 = arith.constant 0 : i32
    %c0_i32_1 = arith.constant 0 : i32
    return %arg0, %arg1, %c0_i32, %c0_i32_0 : i32, i32, i32, i32
  }
  func.func @transform_2(%arg0: i32, %arg1: i32) -> (i32, i32) {
    %c0_i32 = arith.constant 0 : i32
    %c0_i32_0 = arith.constant 0 : i32
    %c0_i32_1 = arith.constant 0 : i32
    return %c0_i32, %c0_i32_0 : i32, i32
  }
  func.func @transform_3(%arg0: i32, %arg1: i32) -> (i32, i32, i32, i32) {
    %c0_i32 = arith.constant 0 : i32
    %c0_i32_0 = arith.constant 0 : i32
    %c0_i32_1 = arith.constant 0 : i32
    return %arg0, %arg1, %c0_i32, %c0_i32_0 : i32, i32, i32, i32
  }
}

</mosaic_0001>

<llo_original>
// kernel: tpu_custom_call.1
$region0: #{tpu_custom_call.1}
  #allocation0 [shape = 'u32[]', space=smem, size = 0x4, offset = 0x4, fixed_abs, tag = 'smem constant byte address 0x4 - core index']
  #allocation1 [shape = 'u32[144,128]{1,0:T(1,128)}', space=vmem, size = 0x12000, scoped, tag = 'internal scratch']
  %s0 = inlined_call_operand.vmem [shape: f32[2,1,40,32], index: 0, kind: input, shape index: {}]
  %s1 = inlined_call_operand.vmem [shape: f32[2,1,40,32], index: 1, kind: input, shape index: {}]
  %s2 = inlined_call_operand.vmem [shape: f32[128,256], index: 2, kind: input, shape index: {}]
  %s3 = inlined_call_operand.hbm [shape: f32[2,1,8,384], index: 3, kind: output, shape index: {}]
  %s4 = sld [smem:[#allocation0]]
  $region45: #{tpu_custom_call.1} parent=0
    _
  %s6 = ssub.s32 1, %s4
  %s7 = scalar_select 0, %s6, %s4
  $region1: #{tpu_custom_call.1} parent=0
    #allocation2 [shape = 'u8[24576]{0}', space=vmem, size = 0x6000, scoped, tag = 'output window, operand 0']
    #allocation3 [shape = 's32[2]{0}', space=sflag, size = 0x8, scoped, tag = 'scoped memory for tpu_custom_call.1']
    %8 = vsyncpa [#allocation3], 0
    %s9 = scalar_lea.sflag [#allocation3], 1
    %10 = vsyncpa %s9, 0
    loop: start=0, step=1, limit=4
    $region2: #{tpu_custom_call.1} parent=1 // loop_pre_header
      _
    $region3: #{tpu_custom_call.1} parent=1 // loop_header
      %s12 = sphi 0, %s16
      %p13 = scmp.ge.s32.totalorder %s12, 4
      %s19 = sphi 0, %s31
      %s20 = sphi 0, %s27
      %s21 = sphi 0, %s19
      %s22 = sphi 0, %s20
      %s23 = sphi 0, %s21
      %s24 = sphi 0, %s22
      %s36 = sphi 0, %s38
      %s39 = sphi 0, %s36
      %s40 = sphi 0, %s39
      %s56 = sphi 0, %s40
      %s64 = sphi 0, %s66
      %s67 = sphi 0, %s64
      %s68 = sphi 0, %s67
      %s84 = sphi 0, %s68
      %s88 = sphi 0, %s88
      %s90 = sphi 0, %s88
      %s91 = sphi 0, %s90
      %s105 = sphi 0, %s91
      %s113 = sphi 0, %s115
      %s116 = sphi 0, %s113
      %s117 = sphi 0, %s116
      %s133 = sphi 0, %s117
    $region4: #{tpu_custom_call.1} parent=1 // loop_header_branch
      %15 = sbr.rel (%p13) target = $region8
    $region5: #{tpu_custom_call.1} parent=1 // loop_body
      %s17 = ssub.s32 %s12, 1
      %s18 = ssub.s32 %s12, 2
      %s25 = sadd.s32 1, %s20
      %p26 = scmp.ge.s32.totalorder %s25, 1
      %s27 = scalar_select %p26, 0, %s25
      %s28 = sadd.s32 1, %s19
      %s29 = scalar_select %p26, %s28, %s19
      %p30 = scmp.ge.s32.totalorder %s29, 2
      %s31 = scalar_select %p30, 0, %s29
      %s32 = ssub.s32 %s19, %s31
      %s33 = ssub.s32 %s20, %s27
      %s34 = sor.u32 %s32, %s33
      %p35 = scmp.eq.s32.totalorder %s34, 0
      %s37 = sadd.s32 %s36, 1
      %s38 = scalar_select %p35, %s36, %s37
      %p41 = pneg %p35
      %p42 = scmp.eq.s32.totalorder %s12, 1
      %p43 = por %p41, %p42
      %p44 = scmp.ne.s32.totalorder %s36, %s39
      %p45 = scmp.eq.s32.totalorder %s12, 0
      %p46 = por %p44, %p45
      %p47 = scmp.ne.s32.totalorder %s36, %s39
      %p48 = scmp.eq.s32.totalorder %s17, 1
      %p49 = por %p47, %p48
      %p50 = scmp.ne.s32.totalorder %s39, %s40
      %p51 = scmp.eq.s32.totalorder %s17, 0
      %p52 = por %p50, %p51
      %p53 = scmp.ne.s32.totalorder %s39, %s40
      %p54 = scmp.eq.s32.totalorder %s18, 1
      %p55 = por %p53, %p54
      %p57 = scmp.ne.s32.totalorder %s40, %s56
      %p58 = scmp.eq.s32.totalorder %s18, 0
      %p59 = por %p57, %p58
      %s60 = ssub.s32 %s19, %s31
      %s61 = ssub.s32 %s20, %s27
      %s62 = sor.u32 %s60, %s61
      %p63 = scmp.eq.s32.totalorder %s62, 0
      %s65 = sadd.s32 %s64, 1
      %s66 = scalar_select %p63, %s64, %s65
      %p69 = pneg %p63
      %p70 = scmp.eq.s32.totalorder %s12, 1
      %p71 = por %p69, %p70
      %p72 = scmp.ne.s32.totalorder %s64, %s67
      %p73 = scmp.eq.s32.totalorder %s12, 0
      %p74 = por %p72, %p73
      %p75 = scmp.ne.s32.totalorder %s64, %s67
      %p76 = scmp.eq.s32.totalorder %s17, 1
      %p77 = por %p75, %p76
      %p78 = scmp.ne.s32.totalorder %s67, %s68
      %p79 = scmp.eq.s32.totalorder %s17, 0
      %p80 = por %p78, %p79
      %p81 = scmp.ne.s32.totalorder %s67, %s68
      %p82 = scmp.eq.s32.totalorder %s18, 1
      %p83 = por %p81, %p82
      %p85 = scmp.ne.s32.totalorder %s68, %s84
      %p86 = scmp.eq.s32.totalorder %s18, 0
      %p87 = por %p85, %p86
      %s89 = sadd.s32 %s88, 1
      %p92 = scmp.eq.s32.totalorder %s12, 1
      %p93 = scmp.ne.s32.totalorder %s88, %s90
      %p94 = scmp.eq.s32.totalorder %s12, 0
      %p95 = por %p93, %p94
      %p96 = scmp.ne.s32.totalorder %s88, %s90
      %p97 = scmp.eq.s32.totalorder %s17, 1
      %p98 = por %p96, %p97
      %p99 = scmp.ne.s32.totalorder %s90, %s91
      %p100 = scmp.eq.s32.totalorder %s17, 0
      %p101 = por %p99, %p100
      %p102 = scmp.ne.s32.totalorder %s90, %s91
      %p103 = scmp.eq.s32.totalorder %s18, 1
      %p104 = por %p102, %p103
      %p106 = scmp.ne.s32.totalorder %s91, %s105
      %p107 = scmp.eq.s32.totalorder %s18, 0
      %p108 = por %p106, %p107
      %s109 = ssub.s32 %s19, %s31
      %s110 = ssub.s32 %s20, %s27
      %s111 = sor.u32 %s109, %s110
      %p112 = scmp.eq.s32.totalorder %s111, 0
      %s114 = sadd.s32 %s113, 1
      %s115 = scalar_select %p112, %s113, %s114
      %p118 = pneg %p112
      %p119 = scmp.eq.s32.totalorder %s12, 1
      %p120 = por %p118, %p119
      %p121 = scmp.ne.s32.totalorder %s113, %s116
      %p122 = scmp.eq.s32.totalorder %s12, 0
      %p123 = por %p121, %p122
      %p124 = scmp.ne.s32.totalorder %s113, %s116
      %p125 = scmp.eq.s32.totalorder %s17, 1
      %p126 = por %p124, %p125
      %p127 = scmp.ne.s32.totalorder %s116, %s117
      %p128 = scmp.eq.s32.totalorder %s17, 0
      %p129 = por %p127, %p128
      %p130 = scmp.ne.s32.totalorder %s116, %s117
      %p131 = scmp.eq.s32.totalorder %s18, 1
      %p132 = por %p130, %p131
      %p134 = scmp.ne.s32.totalorder %s117, %s133
      %p135 = scmp.eq.s32.totalorder %s18, 0
      %p136 = por %p134, %p135
      %p137 = scmp.le.s32.totalorder 1, %s12
      %p138 = scmp.lt.s32.totalorder %s12, 3
      %p139 = pnand %p137, %p138
      %p140 = pneg %p139
      // Predicated region
      $region9: #{tpu_custom_call.1} parent=5 // pred_check
        _
      $region10: #{tpu_custom_call.1} parent=5 // pred_check_branch
        %142 = sbr.rel (%p139) target = $region12
      $region11: #{tpu_custom_call.1} parent=5 // pred_region
        %s143 = ssub.s32 %s12, 1
        // Predicated region
        $region13: #{tpu_custom_call.1} parent=11 // pred_check
          %p144 = pneg %p101
        $region14: #{tpu_custom_call.1} parent=11 // pred_check_branch
          %146 = sbr.rel (%p144) target = $region16
        $region15: #{tpu_custom_call.1} parent=11 // pred_region
          _
        $region16: #{tpu_custom_call.1} parent=11 // pred_fallthru
          _
      $region12: #{tpu_custom_call.1} parent=5 // pred_fallthru
        _
      %p147 = scmp.lt.s32.totalorder %s12, 2
      // Predicated region
      $region17: #{tpu_custom_call.1} parent=5 // pred_check
        %p148 = pneg %p147
      $region18: #{tpu_custom_call.1} parent=5 // pred_check_branch
        %150 = sbr.rel (%p148) target = $region20
      $region19: #{tpu_custom_call.1} parent=5 // pred_region
        // Predicated region
        $region21: #{tpu_custom_call.1} parent=19 // pred_check
          %p151 = pneg %p46
        $region22: #{tpu_custom_call.1} parent=19 // pred_check_branch
          %153 = sbr.rel (%p151) target = $region24
        $region23: #{tpu_custom_call.1} parent=19 // pred_region
          %p154 = scmp.lt.s32.totalorder %s19, 1
          %s155 = scalar_select %p154, %s19, 1
          %p156 = scmp.lt.s32.totalorder %s20, 0
          %s157 = scalar_select %p156, %s20, 0
          %s158 = smul.addr %s157, 5
          %s159 = smul.addr %s155, 5
          %s160 = sadd.s32 %s158, %s159
          %s161 = smul.addr %s160, 8
          %s162 = scalar_lea.vmem %s0, %s161
        $region24: #{tpu_custom_call.1} parent=19 // pred_fallthru
          _
        // Predicated region
        $region25: #{tpu_custom_call.1} parent=19 // pred_check
          %p163 = pneg %p74
        $region26: #{tpu_custom_call.1} parent=19 // pred_check_branch
          %165 = sbr.rel (%p163) target = $region28
        $region27: #{tpu_custom_call.1} parent=19 // pred_region
          %p166 = scmp.lt.s32.totalorder %s19, 1
          %s167 = scalar_select %p166, %s19, 1
          %p168 = scmp.lt.s32.totalorder %s20, 0
          %s169 = scalar_select %p168, %s20, 0
          %s170 = smul.addr %s169, 5
          %s171 = smul.addr %s167, 5
          %s172 = sadd.s32 %s170, %s171
          %s173 = smul.addr %s172, 8
          %s174 = scalar_lea.vmem %s1, %s173
        $region28: #{tpu_custom_call.1} parent=19 // pred_fallthru
          _
      $region20: #{tpu_custom_call.1} parent=5 // pred_fallthru
        _
      %p175 = scmp.le.s32.totalorder 1, %s12
      %p176 = scmp.lt.s32.totalorder %s12, 3
      %p177 = pnand %p175, %p176
      %p178 = pneg %p177
      // Predicated region
      $region29: #{tpu_custom_call.1} parent=5 // pred_check
        _
      $region30: #{tpu_custom_call.1} parent=5 // pred_check_branch
        %180 = sbr.rel (%p177) target = $region32
      $region31: #{tpu_custom_call.1} parent=5 // pred_region
        %s181 = ssub.s32 %s12, 1
        %p182 = scmp.lt.s32.totalorder %s21, 1
        %s183 = scalar_select %p182, %s21, 1
        %p184 = scmp.lt.s32.totalorder %s22, 0
        %s185 = scalar_select %p184, %s22, 0
        %s186 = smul.addr %s185, 5
        %s187 = smul.addr %s183, 5
        %s188 = sadd.s32 %s186, %s187
        %s189 = smul.addr %s188, 8
        %s190 = scalar_lea.vmem %s0, %s189
        %p191 = pneg %p52
        %p192 = pneg %p49
        %p193 = scmp.lt.s32.totalorder %s21, 1
        %s194 = scalar_select %p193, %s21, 1
        %p195 = scmp.lt.s32.totalorder %s22, 0
        %s196 = scalar_select %p195, %s22, 0
        %s197 = smul.addr %s196, 5
        %s198 = smul.addr %s194, 5
        %s199 = sadd.s32 %s197, %s198
        %s200 = smul.addr %s199, 8
        %s201 = scalar_lea.vmem %s1, %s200
        %p202 = pneg %p80
        %p203 = pneg %p77
        %p204 = pneg %p101
        %p205 = pneg %p98
        %p206 = pneg %p129
        %p207 = pneg %p126
        %s208 = sand.u32 %s116, 1
        %s209 = scalar_lea.sflag [#allocation3], %s208
        %s210 = sand.u32 %s116, 1
        %s211 = smul.addr %s210, 24
        %s212 = scalar_lea.vmem [#allocation2], %s211
        %p213 = scmp.lt.s32.totalorder %s21, 1
        %s214 = scalar_select %p213, %s21, 1
        %p215 = scmp.lt.s32.totalorder %s22, 0
        %s216 = scalar_select %p215, %s22, 0
        %s217 = smul.addr %s216, 5
        %s218 = smul.addr %s214, 5
        %s219 = sadd.s32 %s217, %s218
        %s220 = smul.addr %s219, 8
        %s221 = scalar_lea.vmem %s0, %s220
        %p222 = scmp.lt.s32.totalorder %s21, 1
        %s223 = scalar_select %p222, %s21, 1
        %p224 = scmp.lt.s32.totalorder %s22, 0
        %s225 = scalar_select %p224, %s22, 0
        %s226 = smul.addr %s225, 5
        %s227 = smul.addr %s223, 5
        %s228 = sadd.s32 %s226, %s227
        %s229 = smul.addr %s228, 8
        %s230 = scalar_lea.vmem %s1, %s229
        %v231 = vld [vmem:[%s2] sm:$0xff]
        %v232 = vld [vmem:[%s2 + $0x8] sm:$0xff]
        %v233 = vld [vmem:[%s2 + $0x10] sm:$0xff]
        %v234 = vld [vmem:[%s2 + $0x18] sm:$0xff]
        %v235 = vld [vmem:[%s2 + $0x20] sm:$0xff]
        %v236 = vld [vmem:[%s2 + $0x28] sm:$0xff]
        %v237 = vld [vmem:[%s2 + $0x30] sm:$0xff]
        %v238 = vld [vmem:[%s2 + $0x38] sm:$0xff]
        %v239 = vld [vmem:[%s2 + $0x40] sm:$0xff]
        %v240 = vld [vmem:[%s2 + $0x48] sm:$0xff]
        %v241 = vld [vmem:[%s2 + $0x50] sm:$0xff]
        %v242 = vld [vmem:[%s2 + $0x58] sm:$0xff]
        %v243 = vld [vmem:[%s2 + $0x60] sm:$0xff]
        %v244 = vld [vmem:[%s2 + $0x68] sm:$0xff]
        %v245 = vld [vmem:[%s2 + $0x70] sm:$0xff]
        %v246 = vld [vmem:[%s2 + $0x78] sm:$0xff]
        %v247 = vld [vmem:[%s2 + $0x80] sm:$0xff]
        %v248 = vld [vmem:[%s2 + $0x88] sm:$0xff]
        %v249 = vld [vmem:[%s2 + $0x90] sm:$0xff]
        %v250 = vld [vmem:[%s2 + $0x98] sm:$0xff]
        %v251 = vld [vmem:[%s2 + $0xa0] sm:$0xff]
        %v252 = vld [vmem:[%s2 + $0xa8] sm:$0xff]
        %v253 = vld [vmem:[%s2 + $0xb0] sm:$0xff]
        %v254 = vld [vmem:[%s2 + $0xb8] sm:$0xff]
        %v255 = vld [vmem:[%s2 + $0xc0] sm:$0xff]
        %v256 = vld [vmem:[%s2 + $0xc8] sm:$0xff]
        %v257 = vld [vmem:[%s2 + $0xd0] sm:$0xff]
        %v258 = vld [vmem:[%s2 + $0xd8] sm:$0xff]
        %v259 = vld [vmem:[%s2 + $0xe0] sm:$0xff]
        %v260 = vld [vmem:[%s2 + $0xe8] sm:$0xff]
        %v261 = vld [vmem:[%s2 + $0xf0] sm:$0xff]
        %v262 = vld [vmem:[%s2 + $0xf8] sm:$0xff]
        %s263 = smul.u32 %s22, 32
        %s264 = ssub.s32 9, %s263
        %v265 = vlaneseq
        %v266 = vshrl.u32 %v265, 7
        %v267 = vadd.s32 %v266, 8
        %v268 = vadd.s32 %v266, 16
        %v269 = vadd.s32 %v266, 24
        %v270 = vstv 0
        %v271 = vadd.s32 %v266, %v270
        %v272 = vadd.s32 %v267, %v270
        %v273 = vadd.s32 %v268, %v270
        %v274 = vadd.s32 %v269, %v270
        %v275 = vstv %s264
        %vm276 = vcmp.lt.s32.totalorder %v271, %v275
        %vm277 = vcmp.lt.s32.totalorder %v272, %v275
        %vm278 = vcmp.lt.s32.totalorder %v273, %v275
        %vm279 = vcmp.lt.s32.totalorder %v274, %v275
        %v280 = vsel %vm276, 1, 0
        %v281 = vsel %vm277, 1, 0
        %v282 = vsel %vm278, 1, 0
        %v283 = vsel %vm279, 1, 0
        %v284 = vcvt.s32.f32 %v280
        %v285 = vcvt.s32.f32 %v281
        %v286 = vcvt.s32.f32 %v282
        %v287 = vcvt.s32.f32 %v283
        %v288 = vld [vmem:[%s221] sm:$0xff]
        %v289 = vld [vmem:[%s221 + $0x8] sm:$0xff]
        %v290 = vld [vmem:[%s221 + $0x10] sm:$0xff]
        %v291 = vld [vmem:[%s221 + $0x18] sm:$0xff]
        %s292 = sadd.s32 0, 1
        %s293 = scalar_lea.vmem %s221, %s292
        %v294 = vld [vmem:[%s293] sm:$0xff]
        %v295 = vld [vmem:[%s293 + $0x8] sm:$0xff]
        %v296 = vld [vmem:[%s293 + $0x10] sm:$0xff]
        %v297 = vld [vmem:[%s293 + $0x18] sm:$0xff]
        %s298 = sadd.s32 0, 2
        %s299 = scalar_lea.vmem %s221, %s298
        %v300 = vld [vmem:[%s299] sm:$0xff]
        %v301 = vld [vmem:[%s299 + $0x8] sm:$0xff]
        %v302 = vld [vmem:[%s299 + $0x10] sm:$0xff]
        %v303 = vld [vmem:[%s299 + $0x18] sm:$0xff]
        %s304 = sadd.s32 0, 3
        %s305 = scalar_lea.vmem %s221, %s304
        %v306 = vld [vmem:[%s305] sm:$0xff]
        %v307 = vld [vmem:[%s305 + $0x8] sm:$0xff]
        %v308 = vld [vmem:[%s305 + $0x10] sm:$0xff]
        %v309 = vld [vmem:[%s305 + $0x18] sm:$0xff]
        %314 = vrot.lane.b32.xlu0 %v294, 32
        %v315 = vpop.permute.xlu0 %314
        %316 = vrot.lane.b32.xlu0 %v295, 32
        %v317 = vpop.permute.xlu0 %316
        %318 = vrot.lane.b32.xlu0 %v296, 32
        %v319 = vpop.permute.xlu0 %318
        %320 = vrot.lane.b32.xlu0 %v297, 32
        %v321 = vpop.permute.xlu0 %320
        %330 = vrot.lane.b32.xlu0 %v300, 64
        %v331 = vpop.permute.xlu0 %330
        %332 = vrot.lane.b32.xlu0 %v301, 64
        %v333 = vpop.permute.xlu0 %332
        %334 = vrot.lane.b32.xlu0 %v302, 64
        %v335 = vpop.permute.xlu0 %334
        %336 = vrot.lane.b32.xlu0 %v303, 64
        %v337 = vpop.permute.xlu0 %336
        %346 = vrot.lane.b32.xlu0 %v306, 96
        %v347 = vpop.permute.xlu0 %346
        %348 = vrot.lane.b32.xlu0 %v307, 96
        %v349 = vpop.permute.xlu0 %348
        %350 = vrot.lane.b32.xlu0 %v308, 96
        %v351 = vpop.permute.xlu0 %350
        %352 = vrot.lane.b32.xlu0 %v309, 96
        %v353 = vpop.permute.xlu0 %352
        %vm358 = vcmask 261120
        %v359 = vsel %vm358, %v288, %v315
        %v360 = vsel %vm358, %v289, %v317
        %v361 = vsel %vm358, %v290, %v319
        %v362 = vsel %vm358, %v291, %v321
        %vm363 = vcmask 523264
        %v364 = vsel %vm363, %v359, %v331
        %v365 = vsel %vm363, %v360, %v333
        %v366 = vsel %vm363, %v361, %v335
        %v367 = vsel %vm363, %v362, %v337
        %vm368 = vcmask 785408
        %v369 = vsel %vm368, %v364, %v347
        %v370 = vsel %vm368, %v365, %v349
        %v371 = vsel %vm368, %v366, %v351
        %v372 = vsel %vm368, %v367, %v353
        %v373 = vmul.f32 %v369, %v284
        %v374 = vmul.f32 %v370, %v285
        %v375 = vmul.f32 %v371, %v286
        %v376 = vmul.f32 %v372, %v287
        %v377 = vld [vmem:[%s230] sm:$0xff]
        %v378 = vld [vmem:[%s230 + $0x8] sm:$0xff]
        %v379 = vld [vmem:[%s230 + $0x10] sm:$0xff]
        %v380 = vld [vmem:[%s230 + $0x18] sm:$0xff]
        %s381 = scalar_lea.vmem %s230, %s292
        %v382 = vld [vmem:[%s381] sm:$0xff]
        %v383 = vld [vmem:[%s381 + $0x8] sm:$0xff]
        %v384 = vld [vmem:[%s381 + $0x10] sm:$0xff]
        %v385 = vld [vmem:[%s381 + $0x18] sm:$0xff]
        %s386 = scalar_lea.vmem %s230, %s298
        %v387 = vld [vmem:[%s386] sm:$0xff]
        %v388 = vld [vmem:[%s386 + $0x8] sm:$0xff]
        %v389 = vld [vmem:[%s386 + $0x10] sm:$0xff]
        %v390 = vld [vmem:[%s386 + $0x18] sm:$0xff]
        %s391 = scalar_lea.vmem %s230, %s304
        %v392 = vld [vmem:[%s391] sm:$0xff]
        %v393 = vld [vmem:[%s391 + $0x8] sm:$0xff]
        %v394 = vld [vmem:[%s391 + $0x10] sm:$0xff]
        %v395 = vld [vmem:[%s391 + $0x18] sm:$0xff]
        %400 = vrot.lane.b32.xlu0 %v382, 32
        %v401 = vpop.permute.xlu0 %400
        %402 = vrot.lane.b32.xlu0 %v383, 32
        %v403 = vpop.permute.xlu0 %402
        %404 = vrot.lane.b32.xlu0 %v384, 32
        %v405 = vpop.permute.xlu0 %404
        %406 = vrot.lane.b32.xlu0 %v385, 32
        %v407 = vpop.permute.xlu0 %406
        %416 = vrot.lane.b32.xlu0 %v387, 64
        %v417 = vpop.permute.xlu0 %416
        %418 = vrot.lane.b32.xlu0 %v388, 64
        %v419 = vpop.permute.xlu0 %418
        %420 = vrot.lane.b32.xlu0 %v389, 64
        %v421 = vpop.permute.xlu0 %420
        %422 = vrot.lane.b32.xlu0 %v390, 64
        %v423 = vpop.permute.xlu0 %422
        %432 = vrot.lane.b32.xlu0 %v392, 96
        %v433 = vpop.permute.xlu0 %432
        %434 = vrot.lane.b32.xlu0 %v393, 96
        %v435 = vpop.permute.xlu0 %434
        %436 = vrot.lane.b32.xlu0 %v394, 96
        %v437 = vpop.permute.xlu0 %436
        %438 = vrot.lane.b32.xlu0 %v395, 96
        %v439 = vpop.permute.xlu0 %438
        %v444 = vsel %vm358, %v377, %v401
        %v445 = vsel %vm358, %v378, %v403
        %v446 = vsel %vm358, %v379, %v405
        %v447 = vsel %vm358, %v380, %v407
        %v448 = vsel %vm363, %v444, %v417
        %v449 = vsel %vm363, %v445, %v419
        %v450 = vsel %vm363, %v446, %v421
        %v451 = vsel %vm363, %v447, %v423
        %v452 = vsel %vm368, %v448, %v433
        %v453 = vsel %vm368, %v449, %v435
        %v454 = vsel %vm368, %v450, %v437
        %v455 = vsel %vm368, %v451, %v439
        %v456 = vmul.f32 %v452, %v284
        %v457 = vmul.f32 %v453, %v285
        %v458 = vmul.f32 %v454, %v286
        %v459 = vmul.f32 %v455, %v287
        %460 = vmatprep.subr.mxu0 %v232
        %461 = vmatpush1.msra.mxu0 %v231
        %462 = vmatprep.subr.mxu0 %v234
        %463 = vmatpush1.msra.mxu0 %v233
        %464 = vmatprep.subr.mxu0 %v236
        %465 = vmatpush1.msra.mxu0 %v235
        %466 = vmatprep.subr.mxu0 %v238
        %467 = vmatpush1.msra.mxu0 %v237
        %468 = vmatprep.subr.mxu0 %v240
        %469 = vmatpush1.msra.mxu0 %v239
        %470 = vmatprep.subr.mxu0 %v242
        %471 = vmatpush1.msra.mxu0 %v241
        %472 = vmatprep.subr.mxu0 %v244
        %473 = vmatpush1.msra.mxu0 %v243
        %474 = vmatprep.subr.mxu0 %v246
        %475 = vmatpush1.msra.mxu0 %v245
        %476 = vmatprep.subr.mxu0 %v248
        %477 = vmatpush1.msra.mxu0 %v247
        %478 = vmatprep.subr.mxu0 %v250
        %479 = vmatpush1.msra.mxu0 %v249
        %480 = vmatprep.subr.mxu0 %v252
        %481 = vmatpush1.msra.mxu0 %v251
        %482 = vmatprep.subr.mxu0 %v254
        %483 = vmatpush1.msra.mxu0 %v253
        %484 = vmatprep.subr.mxu0 %v256
        %485 = vmatpush1.msra.mxu0 %v255
        %486 = vmatprep.subr.mxu0 %v258
        %487 = vmatpush1.msra.mxu0 %v257
        %488 = vmatprep.subr.mxu0 %v260
        %489 = vmatpush1.msra.mxu0 %v259
        %490 = vmatprep.subr.mxu0 %v262
        %491 = vmatpush1.msra.mxu0 %v261
        %492 = vmatprep.subr.mxu0 0.0
        %493 = vmatpush1.msra.mxu0 0.0
        %494 = vmatprep.subr.mxu0 0.0
        %495 = vmatpush1.msra.mxu0 0.0
        %496 = vmatprep.subr.mxu0 0.0
        %497 = vmatpush1.msra.mxu0 0.0
        %498 = vmatprep.subr.mxu0 0.0
        %499 = vmatpush1.msra.mxu0 0.0
        %500 = vmatprep.subr.mxu0 0.0
        %501 = vmatpush1.msra.mxu0 0.0
        %502 = vmatprep.subr.mxu0 0.0
        %503 = vmatpush1.msra.mxu0 0.0
        %504 = vmatprep.subr.mxu0 0.0
        %505 = vmatpush1.msra.mxu0 0.0
        %506 = vmatprep.subr.mxu0 0.0
        %507 = vmatpush1.msra.mxu0 0.0
        %508 = vmatprep.subr.mxu0 0.0
        %509 = vmatpush1.msra.mxu0 0.0
        %510 = vmatprep.subr.mxu0 0.0
        %511 = vmatpush1.msra.mxu0 0.0
        %512 = vmatprep.subr.mxu0 0.0
        %513 = vmatpush1.msra.mxu0 0.0
        %514 = vmatprep.subr.mxu0 0.0
        %515 = vmatpush1.msra.mxu0 0.0
        %516 = vmatprep.subr.mxu0 0.0
        %517 = vmatpush1.msra.mxu0 0.0
        %518 = vmatprep.subr.mxu0 0.0
        %519 = vmatpush1.msra.mxu0 0.0
        %520 = vmatprep.subr.mxu0 0.0
        %521 = vmatpush1.msra.mxu0 0.0
        %522 = vmatprep.subr.mxu0 0.0
        %523 = vmatpush1.msra.mxu0 0.0
        %524 = vmatprep.mubr.f32.mxu0 0.0
        %525 = vmatmul.mubr.f32.gmra.mrb[0].mxu0 %v373
        %v526 = vpop.f32.mrb[0].mxu0
        %v527 = vadd.f32 0.0, %v526
        %v528 = vpop.f32.mrb[0].mxu0
        %v529 = vadd.f32 0.0, %v528
        %530 = vmatprep.mubr.f32.mxu0 0.0
        %531 = vmatmul.mubr.f32.gmra.mrb[0].mxu0 %v374
        %v532 = vpop.f32.mrb[0].mxu0
        %v533 = vadd.f32 0.0, %v532
        %v534 = vpop.f32.mrb[0].mxu0
        %v535 = vadd.f32 0.0, %v534
        %536 = vmatprep.mubr.f32.mxu0 0.0
        %537 = vmatmul.mubr.f32.gmra.mrb[0].mxu0 %v375
        %v538 = vpop.f32.mrb[0].mxu0
        %v539 = vadd.f32 0.0, %v538
        %v540 = vpop.f32.mrb[0].mxu0
        %v541 = vadd.f32 0.0, %v540
        %542 = vmatprep.mubr.f32.mxu0 0.0
        %543 = vmatmul.mubr.f32.gmra.mrb[0].mxu0 %v376
        %v544 = vpop.f32.mrb[0].mxu0
        %v545 = vadd.f32 0.0, %v544
        %v546 = vpop.f32.mrb[0].mxu0
        %v547 = vadd.f32 0.0, %v546
        %548 = vmatprep.mubr.f32.mxu0 0.0
        %549 = vmatmul.mubr.f32.gmra.mrb[0].mxu0 %v456
        %v550 = vpop.f32.mrb[0].mxu0
        %v551 = vadd.f32 0.0, %v550
        %v552 = vpop.f32.mrb[0].mxu0
        %v553 = vadd.f32 0.0, %v552
        %554 = vmatprep.mubr.f32.mxu0 0.0
        %555 = vmatmul.mubr.f32.gmra.mrb[0].mxu0 %v457
        %v556 = vpop.f32.mrb[0].mxu0
        %v557 = vadd.f32 0.0, %v556
        %v558 = vpop.f32.mrb[0].mxu0
        %v559 = vadd.f32 0.0, %v558
        %560 = vmatprep.mubr.f32.mxu0 0.0
        %561 = vmatmul.mubr.f32.gmra.mrb[0].mxu0 %v458
        %v562 = vpop.f32.mrb[0].mxu0
        %v563 = vadd.f32 0.0, %v562
        %v564 = vpop.f32.mrb[0].mxu0
        %v565 = vadd.f32 0.0, %v564
        %566 = vmatprep.mubr.f32.mxu0 0.0
        %567 = vmatmul.mubr.f32.gmra.mrb[0].mxu0 %v459
        %v568 = vpop.f32.mrb[0].mxu0
        %v569 = vadd.f32 0.0, %v568
        %v570 = vpop.f32.mrb[0].mxu0
        %v571 = vadd.f32 0.0, %v570
        %572 = vdwg.mxu0
        %v573 = vmul.f32 %v527, %v527
        %v574 = vmul.f32 %v533, %v533
        %v575 = vmul.f32 %v539, %v539
        %v576 = vmul.f32 %v545, %v545
        %v577 = vmul.f32 %v551, %v551
        %v578 = vmul.f32 %v557, %v557
        %v579 = vmul.f32 %v563, %v563
        %v580 = vmul.f32 %v569, %v569
        %v581 = vmul.f32 %v529, %v529
        %v582 = vmul.f32 %v535, %v535
        %v583 = vmul.f32 %v541, %v541
        %v584 = vmul.f32 %v547, %v547
        %v585 = vmul.f32 %v553, %v553
        %v586 = vmul.f32 %v559, %v559
        %v587 = vmul.f32 %v565, %v565
        %v588 = vmul.f32 %v571, %v571
        %v589 = vadd.f32 %v573, %v581
        %v590 = vadd.f32 %v574, %v582
        %v591 = vadd.f32 %v575, %v583
        %v592 = vadd.f32 %v576, %v584
        %v593 = vadd.f32 %v577, %v585
        %v594 = vadd.f32 %v578, %v586
        %v595 = vadd.f32 %v579, %v587
        %v596 = vadd.f32 %v580, %v588
        %v597 = vmax.f32 %v589, 1e-08
        %v598 = vmax.f32 %v590, 1e-08
        %v599 = vmax.f32 %v591, 1e-08
        %v600 = vmax.f32 %v592, 1e-08
        %v601 = vmax.f32 %v593, 1e-08
        %v602 = vmax.f32 %v594, 1e-08
        %v603 = vmax.f32 %v595, 1e-08
        %v604 = vmax.f32 %v596, 1e-08
        %v605 = vrsqrt.pop %v597
        %v606 = vmul.f32 %v597, %v605
        %vm607 = vcmp.eq.f32.partialorder %v597, inf
        %v608 = vsel %vm607, %v597, %v606
        %vm609 = vcmp.eq.f32.partialorder %v597, 0.0
        %v610 = vand.u32 %v597, 2147483648
        %v611 = vsel %vm609, %v610, %v608
        %v612 = vrsqrt.pop %v598
        %v613 = vmul.f32 %v598, %v612
        %vm614 = vcmp.eq.f32.partialorder %v598, inf
        %v615 = vsel %vm614, %v598, %v613
        %vm616 = vcmp.eq.f32.partialorder %v598, 0.0
        %v617 = vand.u32 %v598, 2147483648
        %v618 = vsel %vm616, %v617, %v615
        %v619 = vrsqrt.pop %v599
        %v620 = vmul.f32 %v599, %v619
        %vm621 = vcmp.eq.f32.partialorder %v599, inf
        %v622 = vsel %vm621, %v599, %v620
        %vm623 = vcmp.eq.f32.partialorder %v599, 0.0
        %v624 = vand.u32 %v599, 2147483648
        %v625 = vsel %vm623, %v624, %v622
        %v626 = vrsqrt.pop %v600
        %v627 = vmul.f32 %v600, %v626
        %vm628 = vcmp.eq.f32.partialorder %v600, inf
        %v629 = vsel %vm628, %v600, %v627
        %vm630 = vcmp.eq.f32.partialorder %v600, 0.0
        %v631 = vand.u32 %v600, 2147483648
        %v632 = vsel %vm630, %v631, %v629
        %v633 = vrsqrt.pop %v601
        %v634 = vmul.f32 %v601, %v633
        %vm635 = vcmp.eq.f32.partialorder %v601, inf
        %v636 = vsel %vm635, %v601, %v634
        %vm637 = vcmp.eq.f32.partialorder %v601, 0.0
        %v638 = vand.u32 %v601, 2147483648
        %v639 = vsel %vm637, %v638, %v636
        %v640 = vrsqrt.pop %v602
        %v641 = vmul.f32 %v602, %v640
        %vm642 = vcmp.eq.f32.partialorder %v602, inf
        %v643 = vsel %vm642, %v602, %v641
        %vm644 = vcmp.eq.f32.partialorder %v602, 0.0
        %v645 = vand.u32 %v602, 2147483648
        %v646 = vsel %vm644, %v645, %v643
        %v647 = vrsqrt.pop %v603
        %v648 = vmul.f32 %v603, %v647
        %vm649 = vcmp.eq.f32.partialorder %v603, inf
        %v650 = vsel %vm649, %v603, %v648
        %vm651 = vcmp.eq.f32.partialorder %v603, 0.0
        %v652 = vand.u32 %v603, 2147483648
        %v653 = vsel %vm651, %v652, %v650
        %v654 = vrsqrt.pop %v604
        %v655 = vmul.f32 %v604, %v654
        %vm656 = vcmp.eq.f32.partialorder %v604, inf
        %v657 = vsel %vm656, %v604, %v655
        %vm658 = vcmp.eq.f32.partialorder %v604, 0.0
        %v659 = vand.u32 %v604, 2147483648
        %v660 = vsel %vm658, %v659, %v657
        %v661 = vlog2.pop %v611
        %v662 = vmul.f32 %v661, 0.6931472
        %v663 = vlog2.pop %v618
        %v664 = vmul.f32 %v663, 0.6931472
        %v665 = vlog2.pop %v625
        %v666 = vmul.f32 %v665, 0.6931472
        %v667 = vlog2.pop %v632
        %v668 = vmul.f32 %v667, 0.6931472
        %v669 = vlog2.pop %v639
        %v670 = vmul.f32 %v669, 0.6931472
        %v671 = vlog2.pop %v646
        %v672 = vmul.f32 %v671, 0.6931472
        %v673 = vlog2.pop %v653
        %v674 = vmul.f32 %v673, 0.6931472
        %v675 = vlog2.pop %v660
        %v676 = vmul.f32 %v675, 0.6931472
        %v677 = vsub.f32 %v670, %v662
        %v678 = vsub.f32 %v672, %v664
        %v679 = vsub.f32 %v674, %v666
        %v680 = vsub.f32 %v676, %v668
        %v681 = vand.u32 2147483647, %v677
        %v682 = vand.u32 2147483647, %v678
        %v683 = vand.u32 2147483647, %v679
        %v684 = vand.u32 2147483647, %v680
        %v685 = vsub.f32 %v639, %v611
        %v686 = vsub.f32 %v646, %v618
        %v687 = vsub.f32 %v653, %v625
        %v688 = vsub.f32 %v660, %v632
        %v689 = vmul.f32 %v601, %v284
        %v690 = vmul.f32 %v602, %v285
        %v691 = vmul.f32 %v603, %v286
        %v692 = vmul.f32 %v604, %v287
        %v693 = vadd.f32 %v681, %v682
        %v694 = vadd.f32 %v693, %v683
        %v695 = vadd.f32 %v694, %v684
        %v696 = vadd.f32 %v695, 0.0
        %v697 = vmul.f32 %v685, %v685
        %v698 = vmul.f32 %v686, %v686
        %v699 = vmul.f32 %v687, %v687
        %v700 = vmul.f32 %v688, %v688
        %v701 = vadd.f32 %v697, %v698
        %v702 = vadd.f32 %v701, %v699
        %v703 = vadd.f32 %v702, %v700
        %v704 = vadd.f32 %v703, 0.0
        %v705 = vadd.f32 %v689, %v690
        %v706 = vadd.f32 %v705, %v691
        %v707 = vadd.f32 %v706, %v692
        %v708 = vadd.f32 %v707, 0.0
        %709 = vst [vmem:[%s212] sm:$0xff] %v696
        %710 = vst [vmem:[%s212 + $0x8] sm:$0xff] %v704
        %711 = vst [vmem:[%s212 + $0x10] sm:$0xff] %v708
        %s712 = sand.u32 %s116, 1
        %s713 = scalar_lea.sflag [#allocation3], %s712
        %s714 = sand.u32 %s116, 1
        %s715 = smul.addr %s714, 24
        %s716 = scalar_lea.vmem [#allocation2], %s715
        // Predicated region
        $region33: #{tpu_custom_call.1} parent=31 // pred_check
          %p717 = pneg %p126
        $region34: #{tpu_custom_call.1} parent=31 // pred_check_branch
          %719 = sbr.rel (%p717) target = $region36
        $region35: #{tpu_custom_call.1} parent=31 // pred_region
          %s721 = ssub.s32 384, 384
          %722 = vsyncadd %s713, %s721
          %s723 = smul.addr %s22, 3
          %s724 = smul.addr %s21, 3
          %s725 = sadd.s32 %s723, %s724
          %s726 = smul.addr %s725, 128
          %s727 = scalar_lea.hbm %s3, %s726
          %s729 = sshll.u32 %s716, 4
          %s730 = int_to_ptr.vmem [resolvable:$true] %s729
          %732 = dma.vmem_to_hbm [thread:$0]  %s730, 384, %s727, %s713
        $region36: #{tpu_custom_call.1} parent=31 // pred_fallthru
          _
      $region32: #{tpu_custom_call.1} parent=5 // pred_fallthru
        _
      %p733 = scmp.le.s32.totalorder 2, %s12
      // Predicated region
      $region37: #{tpu_custom_call.1} parent=5 // pred_check
        %p734 = pneg %p733
      $region38: #{tpu_custom_call.1} parent=5 // pred_check_branch
        %736 = sbr.rel (%p734) target = $region40
      $region39: #{tpu_custom_call.1} parent=5 // pred_region
        %s737 = ssub.s32 %s12, 2
        // Predicated region
        $region41: #{tpu_custom_call.1} parent=39 // pred_check
          %p738 = pneg %p132
        $region42: #{tpu_custom_call.1} parent=39 // pred_check_branch
          %740 = sbr.rel (%p738) target = $region44
        $region43: #{tpu_custom_call.1} parent=39 // pred_region
          %s741 = sand.u32 %s117, 1
          %s742 = scalar_lea.sflag [#allocation3], %s741
          %s743 = sand.u32 %s117, 1
          %s744 = smul.addr %s743, 24
          %s745 = scalar_lea.vmem [#allocation2], %s744
          %746 = dma.done %s742, 384
        $region44: #{tpu_custom_call.1} parent=39 // pred_fallthru
          _
      $region40: #{tpu_custom_call.1} parent=5 // pred_fallthru
        _
    $region6: #{tpu_custom_call.1} parent=1 // loop_footer
      %s16 = sadd.s32 1, %s12
    $region7: #{tpu_custom_call.1} parent=1 // loop_footer_branch
      %11 = sbr.rel target = $region3
    $region8: #{tpu_custom_call.1} parent=1 // loop_exit
      _
    %747 = vsyncpa [#allocation3], 1
    %s748 = scalar_lea.sflag [#allocation3], 1
    %749 = vsyncpa %s748, 1

</llo_original>
